<compile_context>
chip_gen: v5e
topology: v5e:2x2
jax: 0.10.0
libtpu: 0.0.40
codegen_flags: <defaults>
</compile_context>

<pallas_src>
import jax
import jax.numpy as jnp
from jax import lax
from jax.experimental import pallas as pl
from jax.experimental.pallas import tpu as pltpu


def _round_up(x: int, m: int) -> int:
    return ((x + m - 1) // m) * m


def _linear_kernel(x_ref, w_ref, b_ref, o_ref):
    # x_ref: (tm, tk)            activations tile
    # w_ref: (tn, tk)            weight tile in PyTorch (Out, In) layout
    # b_ref: (1, tn)             bias row (f32)
    # o_ref: (tm, tn) f32        output tile; doubles as the K-accumulator
    #                            (resident across K: out index_map ignores k)
    k = pl.program_id(2)

    @pl.when(k == 0)
    def _():
        o_ref[...] = jnp.zeros_like(o_ref)

    # x @ W.T without materializing W.T: contract last axis of both operands.
    o_ref[...] += lax.dot_general(
        x_ref[...],
        w_ref[...],
        dimension_numbers=(((1,), (1,)), ((), ())),
        preferred_element_type=jnp.float32,
    )

    @pl.when(k == pl.num_programs(2) - 1)
    def _():
        # Bias added exactly once per output tile, in the finalize branch.
        o_ref[...] += b_ref[...]


def mlr_forward(
    x,
    weight,
    bias,
    *,
    tm: int = 256,
    tn: int = 512,
    tk: int = 512,
    use_bf16: bool = True,
    force_kernel: bool = False,
):
    """Forward of MLR (nn.Linear): y = x @ W.T + b as a tiled Pallas kernel."""
    B, In = x.shape
    Out, In_w = weight.shape
    assert In == In_w, (In, In_w)
    assert bias.shape == (Out,), bias.shape

    # Small-problem fast path: a single tiny launch is dominated by wrapper
    # HLOs + fixed overhead; a plain fused XLA dot is strictly faster.
    if not force_kernel and (B * In * Out) <= (1 << 18):
        return (x.astype(jnp.float32) @ weight.astype(jnp.float32).T
                + bias.astype(jnp.float32))

    # Clamp tiles for small shapes while keeping the (8, 128) constraint:
    # sublane dims multiples of 8, lane dims multiples of 128.
    tm = max(8, min(tm, _round_up(B, 8)))
    tn = max(128, min(tn, _round_up(Out, 128)))
    tk = max(128, min(tk, _round_up(In, 128)))

    # Only K genuinely needs zero padding (garbage there would corrupt valid
    # outputs).  M/N edge tiles are handled by Pallas masked loads/stores.
    Inp = _round_up(In, tk)

    compute_dtype = jnp.bfloat16 if use_bf16 else jnp.float32
    xk = x.astype(compute_dtype)
    wk = weight.astype(compute_dtype)   # stays in (Out, In) layout: no transpose
    if Inp != In:
        xk = jnp.pad(xk, ((0, 0), (0, Inp - In)))
        wk = jnp.pad(wk, ((0, 0), (0, Inp - In)))
    b2d = bias.astype(jnp.float32).reshape(1, Out)

    grid = (pl.cdiv(B, tm), pl.cdiv(Out, tn), Inp // tk)

    # Explicit VMEM budget: double-buffered inputs + double-buffered f32 output
    # block, plus headroom.  Cap below v7x's 64 MiB physical VMEM.
    in_bytes = jnp.dtype(compute_dtype).itemsize
    vmem_est = (2 * (tm * tk + tn * tk) * in_bytes    # x, W tiles (2x buffered)
                + 2 * tn * 4                          # bias row
                + 2 * tm * tn * 4)                    # output/accumulator tile
    vmem_limit = int(min(max(2 * vmem_est, 16 * 1024 * 1024), 48 * 1024 * 1024))

    out = pl.pallas_call(
        _linear_kernel,
        out_shape=jax.ShapeDtypeStruct((B, Out), jnp.float32),
        grid_spec=pltpu.PrefetchScalarGridSpec(
            num_scalar_prefetch=0,
            grid=grid,
            in_specs=[
                # x tile: (tm, tk), indexed by (i, k)
                pl.BlockSpec((tm, tk), lambda i, j, k: (i, k)),
                # W tile (PyTorch layout): (tn, tk), indexed by (j, k)
                pl.BlockSpec((tn, tk), lambda i, j, k: (j, k)),
                # bias row: (1, tn), indexed by j only (reused across i, k)
                pl.BlockSpec((1, tn), lambda i, j, k: (0, j)),
            ],
            out_specs=pl.BlockSpec((tm, tn), lambda i, j, k: (i, j)),
        ),
        compiler_params=pltpu.CompilerParams(
            # M, N parallel (megacore sharding); K (reduction) last + arbitrary.
            dimension_semantics=("parallel", "parallel", "arbitrary"),
            vmem_limit_bytes=vmem_limit,
        ),
    )(xk, wk, b2d)

    return out


if __name__ == "__main__":
    key = jax.random.PRNGKey(0)
    kx, kw, kb, kx2, kw2, kb2, kx3, kw3, kb3 = jax.random.split(key, 9)

    # --- Case 1: tiny MLR(input_size, output_size) shapes, kernel forced,
    #     f32 MXU path for tight comparison against the PyTorch-style ref. ---
    batch, input_size, output_size = 8, 32, 16
    bound = 1.0 / (input_size ** 0.5)
    x = jax.random.normal(kx, (batch, input_size), dtype=jnp.float32)
    weight = jax.random.uniform(
        kw, (output_size, input_size), dtype=jnp.float32, minval=-bound, maxval=bound
    )
    bias = jax.random.uniform(
        kb, (output_size,), dtype=jnp.float32, minval=-bound, maxval=bound
    )

    y = mlr_forward(x, weight, bias, use_bf16=False, force_kernel=True)
    jax.block_until_ready(y)
    y_ref = x @ weight.T + bias
    assert y.shape == (batch, output_size)
    assert jnp.allclose(y, y_ref, atol=1e-5, rtol=1e-5)

    # Same tiny shapes via the default path (small-problem fast path).
    y_fast = mlr_forward(x, weight, bias)
    jax.block_until_ready(y_fast)
    assert jnp.allclose(y_fast, y_ref, atol=1e-5, rtol=1e-5)

    # --- Case 2: non-aligned shapes (K padding + N/M edge masking), bf16. ---
    B2, In2, Out2 = 64, 200, 144
    bound2 = 1.0 / (In2 ** 0.5)
    x2 = jax.random.normal(kx2, (B2, In2), dtype=jnp.float32)
    w2 = jax.random.uniform(
        kw2, (Out2, In2), dtype=jnp.float32, minval=-bound2, maxval=bound2
    )
    b2 = jax.random.uniform(
        kb2, (Out2,), dtype=jnp.float32, minval=-bound2, maxval=bound2
    )
    y2 = mlr_forward(x2, w2, b2, force_kernel=True)
    jax.block_until_ready(y2)
    y2_ref = x2 @ w2.T + b2
    assert y2.shape == (B2, Out2)
    assert jnp.allclose(y2, y2_ref, atol=2e-2, rtol=2e-2)

    # --- Case 3: multi-tile (M, N, K) grid with bf16 MXU inputs (default). ---
    B3, In3, Out3 = 512, 1024, 640
    bound3 = 1.0 / (In3 ** 0.5)
    x3 = jax.random.normal(kx3, (B3, In3), dtype=jnp.float32)
    w3 = jax.random.uniform(
        kw3, (Out3, In3), dtype=jnp.float32, minval=-bound3, maxval=bound3
    )
    b3 = jax.random.uniform(
        kb3, (Out3,), dtype=jnp.float32, minval=-bound3, maxval=bound3
    )
    y3 = mlr_forward(x3, w3, b3)  # grid (2, 2, 2): tm=256, tn=512, tk=512
    jax.block_until_ready(y3)
    y3_ref = x3 @ w3.T + b3
    assert y3.shape == (B3, Out3)
    assert jnp.allclose(y3, y3_ref, atol=2e-2, rtol=2e-2)

    print("KERNEL_OK")
</pallas_src>

<mosaic_0001>
module attributes {stable_mosaic.version = 11 : i64} {
  func.func @_linear_kernel(%arg0: i32, %arg1: i32, %arg2: i32, %arg3: memref<8x128xf32, #tpu.memory_space<vmem>>, %arg4: memref<128x128xf32, #tpu.memory_space<vmem>>, %arg5: memref<1x128xf32, #tpu.memory_space<vmem>>, %arg6: memref<8x128xf32, #tpu.memory_space<vmem>>) attributes {dimension_semantics = [#tpu.dimension_semantics<parallel>, #tpu.dimension_semantics<parallel>, #tpu.dimension_semantics<arbitrary>], iteration_bounds = array<i64: 1, 1, 1>, scalar_prefetch = 0 : i64, scratch_operands = 0 : i64, tpu.core_type = #tpu.core_type<tc>, window_params = [{transform_indices = @transform_0, window_bounds = array<i64: 8, 128>}, {transform_indices = @transform_1, window_bounds = array<i64: 128, 128>}, {transform_indices = @transform_2, window_bounds = array<i64: 1, 128>}, {transform_indices = @transform_3, window_bounds = array<i64: 8, 128>}]} {
    %c0_i32 = arith.constant 0 : i32
    %0 = arith.cmpi eq, %arg2, %c0_i32 : i32
    %1 = arith.extui %0 : i1 to i32
    %c0_i32_0 = arith.constant 0 : i32
    %2 = arith.cmpi ne, %1, %c0_i32_0 : i32
    scf.if %2 {
      %cst_10 = arith.constant 0.000000e+00 : f32
      %12 = vector.broadcast %cst_10 : f32 to vector<8x128xf32>
      %c0_11 = arith.constant 0 : index
      %c0_12 = arith.constant 0 : index
      %13 = vector.load %arg6[%c0_11, %c0_12] : memref<8x128xf32, #tpu.memory_space<vmem>>, vector<8x128xf32>
      tpu.vector_store %arg6[%c0_11, %c0_12], %12 {strides = array<i32>} : memref<8x128xf32, #tpu.memory_space<vmem>>, vector<8x128xf32>,
    } else {
    }
    %c0 = arith.constant 0 : index
    %c0_1 = arith.constant 0 : index
    %3 = vector.load %arg6[%c0, %c0_1] : memref<8x128xf32, #tpu.memory_space<vmem>>, vector<8x128xf32>
    %c0_2 = arith.constant 0 : index
    %c0_3 = arith.constant 0 : index
    %4 = vector.load %arg3[%c0_2, %c0_3] : memref<8x128xf32, #tpu.memory_space<vmem>>, vector<8x128xf32>
    %c0_4 = arith.constant 0 : index
    %c0_5 = arith.constant 0 : index
    %5 = vector.load %arg4[%c0_4, %c0_5] : memref<128x128xf32, #tpu.memory_space<vmem>>, vector<128x128xf32>
    %cst = arith.constant dense<0.000000e+00> : vector<8x128xf32>
    %6 = tpu.matmul %4, %5, %cst {dimension_numbers = #tpu.dot_dimension_numbers<[1], [1], [0], [0], [0, 0, 1, 0], [], []>} : vector<8x128xf32>, vector<128x128xf32>, vector<8x128xf32> -> vector<8x128xf32>
    %7 = arith.addf %3, %6 : vector<8x128xf32>
    %c0_6 = arith.constant 0 : index
    %c0_7 = arith.constant 0 : index
    %8 = vector.load %arg6[%c0_6, %c0_7] : memref<8x128xf32, #tpu.memory_space<vmem>>, vector<8x128xf32>
    tpu.vector_store %arg6[%c0_6, %c0_7], %7 {strides = array<i32>} : memref<8x128xf32, #tpu.memory_space<vmem>>, vector<8x128xf32>,
    %c0_i32_8 = arith.constant 0 : i32
    %9 = arith.cmpi eq, %arg2, %c0_i32_8 : i32
    %10 = arith.extui %9 : i1 to i32
    %c0_i32_9 = arith.constant 0 : i32
    %11 = arith.cmpi ne, %10, %c0_i32_9 : i32
    scf.if %11 {
      %c0_10 = arith.constant 0 : index
      %c0_11 = arith.constant 0 : index
      %12 = vector.load %arg6[%c0_10, %c0_11] : memref<8x128xf32, #tpu.memory_space<vmem>>, vector<8x128xf32>
      %c0_12 = arith.constant 0 : index
      %c0_13 = arith.constant 0 : index
      %13 = vector.load %arg5[%c0_12, %c0_13] : memref<1x128xf32, #tpu.memory_space<vmem>>, vector<1x128xf32>
      %14 = vector.broadcast %13 : vector<1x128xf32> to vector<8x128xf32>
      %15 = arith.addf %12, %14 : vector<8x128xf32>
      %c0_14 = arith.constant 0 : index
      %c0_15 = arith.constant 0 : index
      %16 = vector.load %arg6[%c0_14, %c0_15] : memref<8x128xf32, #tpu.memory_space<vmem>>, vector<8x128xf32>
      tpu.vector_store %arg6[%c0_14, %c0_15], %15 {strides = array<i32>} : memref<8x128xf32, #tpu.memory_space<vmem>>, vector<8x128xf32>,
    } else {
    }
    return
  }
  func.func @transform_0(%arg0: i32, %arg1: i32, %arg2: i32) -> (i32, i32) {
    %c0_i32 = arith.constant 0 : i32
    return %arg0, %arg2 : i32, i32
  }
  func.func @transform_1(%arg0: i32, %arg1: i32, %arg2: i32) -> (i32, i32) {
    %c0_i32 = arith.constant 0 : i32
    return %arg1, %arg2 : i32, i32
  }
  func.func @transform_2(%arg0: i32, %arg1: i32, %arg2: i32) -> (i32, i32) {
    %c0_i32 = arith.constant 0 : i32
    %c0_i32_0 = arith.constant 0 : i32
    return %c0_i32, %arg1 : i32, i32
  }
  func.func @transform_3(%arg0: i32, %arg1: i32, %arg2: i32) -> (i32, i32) {
    %c0_i32 = arith.constant 0 : i32
    return %arg0, %arg1 : i32, i32
  }
}

</mosaic_0001>

<llo_original>
// kernel: tpu_custom_call.1
$region0: #{tpu_custom_call.1}
  #allocation0 [shape = 'u32[]', space=smem, size = 0x4, offset = 0x4, fixed_abs, tag = 'smem constant byte address 0x4 - core index']
  #allocation1 [shape = 'u32[72,128]{1,0:T(1,128)}', space=vmem, size = 0x9000, scoped, tag = 'internal scratch']
  %s0 = inlined_call_operand.hbm [shape: f32[8,128], index: 0, kind: input, shape index: {}]
  %s1 = inlined_call_operand.hbm [shape: f32[16,128], index: 1, kind: input, shape index: {}]
  %s2 = inlined_call_operand.vmem [shape: f32[1,16], index: 2, kind: input, shape index: {}]
  %s3 = inlined_call_operand.hbm [shape: f32[8,16], index: 3, kind: output, shape index: {}]
  %s4 = sld [smem:[#allocation0]]
  $region38: #{tpu_custom_call.1} parent=0
    _
  %s6 = ssub.s32 1, %s4
  %s7 = scalar_select 0, %s6, %s4
  $region1: #{tpu_custom_call.1} parent=0
    #allocation2 [shape = 'u8[4096]{0}', space=vmem, size = 0x1000, scoped, tag = 'input window, operand 0, single buffered']
    #allocation3 [shape = 's32[1]{0}', space=sflag, size = 0x4, scoped, tag = 'scoped memory for tpu_custom_call.1']
    #allocation4 [shape = 's32[1]{0}', space=sflag, size = 0x4, scoped, tag = 'scoped memory for tpu_custom_call.1']
    #allocation5 [shape = 'u8[65536]{0}', space=vmem, size = 0x10000, scoped, tag = 'input window, operand 1, single buffered']
    #allocation6 [shape = 's32[1]{0}', space=sflag, size = 0x4, scoped, tag = 'scoped memory for tpu_custom_call.1']
    #allocation7 [shape = 'u8[4096]{0}', space=vmem, size = 0x1000, scoped, tag = 'output window, operand 0, single buffered']
    %8 = vsyncpa [#allocation3], 0
    %9 = vsyncpa [#allocation6], 0
    %10 = vsyncpa [#allocation4], 0
    // Predicated region
    $region2: #{tpu_custom_call.1} parent=1 // pred_check
      _
    $region3: #{tpu_custom_call.1} parent=1 // pred_check_branch
      %12 = sbr.rel (0) target = $region5
    $region4: #{tpu_custom_call.1} parent=1 // pred_region
      %14 = vsyncadd [#allocation3], 0
      %s16 = sshll.u32 %s0, 4
      %s17 = int_to_ptr.hbm [resolvable:$true] %s16
      %s18 = sshll.u32 [#allocation2], 4
      %s19 = int_to_ptr.vmem [resolvable:$true] %s18
      %21 = dma.hbm_to_vmem [thread:$0]  %s17, 128, %s19, [#allocation3]
    $region5: #{tpu_custom_call.1} parent=1 // pred_fallthru
      _
    // Predicated region
    $region6: #{tpu_custom_call.1} parent=1 // pred_check
      _
    $region7: #{tpu_custom_call.1} parent=1 // pred_check_branch
      %23 = sbr.rel (0) target = $region9
    $region8: #{tpu_custom_call.1} parent=1 // pred_region
      %25 = vsyncadd [#allocation6], 1792
      %s26 = sshll.u32 %s1, 4
      %s27 = int_to_ptr.hbm [resolvable:$true] %s26
      %s28 = sshll.u32 [#allocation5], 4
      %s29 = int_to_ptr.vmem [resolvable:$true] %s28
      %34 = dma.hbm_to_vmem [thread:$0]  %s27, 256, %s29, [#allocation6], 128, 128, 8
    $region9: #{tpu_custom_call.1} parent=1 // pred_fallthru
      _
    // Predicated region
    $region10: #{tpu_custom_call.1} parent=1 // pred_check
      _
    $region11: #{tpu_custom_call.1} parent=1 // pred_check_branch
      %36 = sbr.rel (0) target = $region13
    $region12: #{tpu_custom_call.1} parent=1 // pred_region
      _
    $region13: #{tpu_custom_call.1} parent=1 // pred_fallthru
      _
    // Predicated region
    $region14: #{tpu_custom_call.1} parent=1 // pred_check
      _
    $region15: #{tpu_custom_call.1} parent=1 // pred_check_branch
      %38 = sbr.rel (0) target = $region17
    $region16: #{tpu_custom_call.1} parent=1 // pred_region
      %40 = dma.done [#allocation3], 128
    $region17: #{tpu_custom_call.1} parent=1 // pred_fallthru
      _
    // Predicated region
    $region18: #{tpu_custom_call.1} parent=1 // pred_check
      _
    $region19: #{tpu_custom_call.1} parent=1 // pred_check_branch
      %42 = sbr.rel (0) target = $region21
    $region20: #{tpu_custom_call.1} parent=1 // pred_region
      %44 = dma.done [#allocation6], 2048
    $region21: #{tpu_custom_call.1} parent=1 // pred_fallthru
      _
    %p45 = scmp.eq.s32.totalorder 0, 0
    // Predicated region
    $region22: #{tpu_custom_call.1} parent=1 // pred_check
      %p46 = pneg %p45
    $region23: #{tpu_custom_call.1} parent=1 // pred_check_branch
      %48 = sbr.rel (%p46) target = $region25
    $region24: #{tpu_custom_call.1} parent=1 // pred_region
      %49 = vst [vmem:[#allocation7] sm:$0xff] 0.0
    $region25: #{tpu_custom_call.1} parent=1 // pred_fallthru
      _
    %v50 = vld [vmem:[#allocation7] sm:$0xff]
    %v51 = vld [vmem:[#allocation2] sm:$0xff]
    %v52 = vld [vmem:[#allocation5] sm:$0xff]
    %v53 = vld [vmem:[#allocation5 + $0x8] sm:$0xff]
    %v54 = vld [vmem:[#allocation5 + $0x10] sm:$0xff]
    %v55 = vld [vmem:[#allocation5 + $0x18] sm:$0xff]
    %v56 = vld [vmem:[#allocation5 + $0x20] sm:$0xff]
    %v57 = vld [vmem:[#allocation5 + $0x28] sm:$0xff]
    %v58 = vld [vmem:[#allocation5 + $0x30] sm:$0xff]
    %v59 = vld [vmem:[#allocation5 + $0x38] sm:$0xff]
    %v60 = vld [vmem:[#allocation5 + $0x40] sm:$0xff]
    %v61 = vld [vmem:[#allocation5 + $0x48] sm:$0xff]
    %v62 = vld [vmem:[#allocation5 + $0x50] sm:$0xff]
    %v63 = vld [vmem:[#allocation5 + $0x58] sm:$0xff]
    %v64 = vld [vmem:[#allocation5 + $0x60] sm:$0xff]
    %v65 = vld [vmem:[#allocation5 + $0x68] sm:$0xff]
    %v66 = vld [vmem:[#allocation5 + $0x70] sm:$0xff]
    %v67 = vld [vmem:[#allocation5 + $0x78] sm:$0xff]
    %68 = vmatpush.xpose.msra.mxu0 %v67
    %69 = vmatpush.xpose.msra.mxu0 %v66
    %70 = vmatpush.xpose.msra.mxu0 %v65
    %71 = vmatpush.xpose.msra.mxu0 %v64
    %72 = vmatpush.xpose.msra.mxu0 %v63
    %73 = vmatpush.xpose.msra.mxu0 %v62
    %74 = vmatpush.xpose.msra.mxu0 %v61
    %75 = vmatpush.xpose.msra.mxu0 %v60
    %76 = vmatpush.xpose.msra.mxu0 %v59
    %77 = vmatpush.xpose.msra.mxu0 %v58
    %78 = vmatpush.xpose.msra.mxu0 %v57
    %79 = vmatpush.xpose.msra.mxu0 %v56
    %80 = vmatpush.xpose.msra.mxu0 %v55
    %81 = vmatpush.xpose.msra.mxu0 %v54
    %82 = vmatpush.xpose.msra.mxu0 %v53
    %83 = vmatpush.xpose.msra.mxu0 %v52
    %84 = vmatmul.f32.gmra.mxu0 %v51
    %v85 = vpop.f32.mrf.mxu0
    %v86 = vadd.f32 0.0, %v85
    %87 = vdwg.mxu0
    %v88 = vadd.f32 %v50, %v86
    %89 = vst [vmem:[#allocation7] sm:$0xff] %v88
    // Predicated region
    $region26: #{tpu_custom_call.1} parent=1 // pred_check
      %p90 = pneg %p45
    $region27: #{tpu_custom_call.1} parent=1 // pred_check_branch
      %92 = sbr.rel (%p90) target = $region29
    $region28: #{tpu_custom_call.1} parent=1 // pred_region
      %v93 = vld [vmem:[#allocation7] sm:$0xff]
      %v94 = vld [vmem:[%s2] sm:$0x1]
      %v96 = vperm.slane %v94, 0
      %v98 = vadd.f32 %v93, %v96
      %99 = vst [vmem:[#allocation7] sm:$0xff] %v98
    $region29: #{tpu_custom_call.1} parent=1 // pred_fallthru
      _
    // Predicated region
    $region30: #{tpu_custom_call.1} parent=1 // pred_check
      _
    $region31: #{tpu_custom_call.1} parent=1 // pred_check_branch
      %101 = sbr.rel (0) target = $region33
    $region32: #{tpu_custom_call.1} parent=1 // pred_region
      %103 = vsyncadd [#allocation4], 0
      %s105 = sshll.u32 [#allocation7], 4
      %s106 = int_to_ptr.vmem [resolvable:$true] %s105
      %s107 = sshll.u32 %s3, 4
      %s108 = int_to_ptr.hbm [resolvable:$true] %s107
      %110 = dma.vmem_to_hbm [thread:$0]  %s106, 128, %s108, [#allocation4]
    $region33: #{tpu_custom_call.1} parent=1 // pred_fallthru
      _
    // Predicated region
    $region34: #{tpu_custom_call.1} parent=1 // pred_check
      _
    $region35: #{tpu_custom_call.1} parent=1 // pred_check_branch
      %112 = sbr.rel (0) target = $region37
    $region36: #{tpu_custom_call.1} parent=1 // pred_region
      %114 = dma.done [#allocation4], 128
    $region37: #{tpu_custom_call.1} parent=1 // pred_fallthru
      _
    %115 = vsyncpa [#allocation3], 1
    %116 = vsyncpa [#allocation6], 1
    %117 = vsyncpa [#allocation4], 1

</llo_original>
